<compile_context>
chip_gen: v5e
topology: v5e:2x2
jax: 0.10.0
libtpu: 0.0.40
codegen_flags: <defaults>
</compile_context>

<pallas_src>
import math

import jax
import jax.numpy as jnp
from jax.experimental import pallas as pl
from jax.experimental.pallas import tpu as pltpu


def _pe_add_kernel(x_ref, pe_ref, o_ref):
    # x_ref:  (TS, TC) tile of the (seq, batch*d_model) view
    # pe_ref: (1,  TC) tile of flattened pe[:batch]; broadcasts over the TS rows
    # o_ref:  (TS, TC) output tile
    o_ref[...] = x_ref[...] + pe_ref[...]


def make_positional_encoding_table(d_model: int, max_len: int = 5000,
                                   dtype=jnp.float32):
    """Builds pe[max_len, d_model] identical to the PyTorch buffer (squeezed)."""
    position = jnp.arange(max_len, dtype=jnp.float32)[:, None]          # (L, 1)
    div_term = jnp.exp(
        jnp.arange(0, d_model, 2, dtype=jnp.float32)
        * (-math.log(10000.0) / d_model))                               # (D/2,)
    angles = position * div_term                                        # (L, D/2)
    # interleave -> pe[:, 0::2] = sin, pe[:, 1::2] = cos  (d_model even, as in PyTorch)
    pe = jnp.stack([jnp.sin(angles), jnp.cos(angles)], axis=-1).reshape(max_len, d_model)
    return pe.astype(dtype)


def _hw_budgets():
    """Generation-aware (target_tile_bytes, vmem_limit_bytes)."""
    vmem = 64 << 20  # conservative default = v7x-sized VMEM (safe everywhere)
    try:
        info = pltpu.get_tpu_info()
        vmem = int(getattr(info, "vmem_capacity_bytes", vmem))
    except Exception:
        pass
    if vmem >= (100 << 20):          # v5e / v6e: 128 MiB physical VMEM
        return 16 << 20, 80 << 20    # bigger tiles, generous scoped limit
    return 10 << 20, 48 << 20        # v7x: 4x10 MiB double-buffered < 48 MiB < 64 MiB


def _round_up(v: int, m: int) -> int:
    return ((v + m - 1) // m) * m


def _choose_tiles(s: int, bd: int, itemsize: int, target_tile_bytes: int):
    """Pick (ts, tc) block dims for the lane-dense (s, bd) view."""
    # Sub-32-bit dtypes pack rows along sublanes (bf16->16, int8/fp8->32).
    sub_mult = 8 * max(1, 4 // itemsize)
    row_bytes = bd * itemsize

    if sub_mult * row_bytes > target_tile_bytes:
        # Even a minimal sublane-group of full rows busts the budget:
        # tile the flattened B*D (lane) axis too, in multiples of 128 lanes.
        ts = sub_mult
        tc = (target_tile_bytes // (ts * itemsize)) // 128 * 128
        tc = max(128, min(tc, bd))
        return ts, tc

    tc = bd
    ts = (target_tile_bytes // max(row_bytes, 1)) // sub_mult * sub_mult
    ts = max(sub_mult, ts)
    ts = min(ts, s)

    # Force >=2 (prefer >=4) grid steps for non-trivial single-step cases so
    # DMA overlaps writeback and v7x can shard the seq axis across its 2 TCs.
    if ts >= s and s * row_bytes > (2 << 20) and s >= 2 * sub_mult:
        cand = _round_up(max(1, s // 4), sub_mult)
        if cand >= s:
            cand = _round_up(max(1, s // 2), 8)
        if cand < s:
            ts = cand
    return ts, tc


def positional_encoding_forward(x, pe, *, donate_x: bool = False):
    """
    Args:
      x:  [seq_len, batch, d_model]  (PyTorch input layout)
      pe: [max_len, d_model]         positional table (squeezed buffer)
      donate_x: set True when the caller donates x (enables in-place aliasing).
    Returns:
      [seq_len, batch, d_model]
    """
    s, b, d = x.shape
    if b > pe.shape[0]:
        raise ValueError(
            f"batch ({b}) exceeds positional table length ({pe.shape[0]}); "
            "the module slices pe[:batch] (faithful PyTorch quirk).")
    bd = b * d

    # PyTorch quirk: after the permute x.size(0) == batch, so pe is sliced by
    # the *batch* size and broadcast over seq (NOT standard seq-indexed PE).
    pe_slice = pe[:b].astype(x.dtype)                 # (B, D)

    # Lane-dense 2-D views (contiguous reshape: no copy).
    x2 = x.reshape(s, bd)
    pe2 = pe_slice.reshape(1, bd)

    itemsize = x.dtype.itemsize
    target_tile_bytes, vmem_limit = _hw_budgets()
    ts, tc = _choose_tiles(s, bd, itemsize, target_tile_bytes)
    grid = (pl.cdiv(s, ts), pl.cdiv(bd, tc))

    cost = pl.CostEstimate(
        flops=s * bd,
        transcendentals=0,
        bytes_accessed=(2 * s * bd + bd) * itemsize)

    out2 = pl.pallas_call(
        _pe_add_kernel,
        out_shape=jax.ShapeDtypeStruct((s, bd), x.dtype),
        grid=grid,
        in_specs=[
            pl.BlockSpec((ts, tc), lambda i, j: (i, j)),   # x: seq x B*D tiled
            pl.BlockSpec((1, tc), lambda i, j: (0, j)),    # pe: VMEM-resident per column chunk
        ],
        out_specs=pl.BlockSpec((ts, tc), lambda i, j: (i, j)),
        compiler_params=pltpu.CompilerParams(
            dimension_semantics=("parallel", "parallel"),  # no reduction; v7x 2-TC shard
            vmem_limit_bytes=vmem_limit,
        ),
        cost_estimate=cost,
        input_output_aliases=({0: 0} if donate_x else {}),
    )(x2, pe2)

    # dropout (p=0.1) in eval mode == identity
    return out2.reshape(s, b, d)


def positional_encoding_reference(x, pe):
    """Pure-JAX reference mirroring the PyTorch code line by line."""
    xt = jnp.transpose(x, (1, 0, 2))          # [B, S, D]
    xt = xt + pe[: xt.shape[0]][:, None, :]   # pe[:B] -> (B, 1, D)
    return jnp.transpose(xt, (1, 0, 2))       # [S, B, D]


if __name__ == "__main__":
    key = jax.random.PRNGKey(0)

    seq_len, batch, d_model = 8, 2, 32
    max_len = 64  # small synthetic table (>= batch)

    x = jax.random.normal(key, (seq_len, batch, d_model), dtype=jnp.float32)
    pe = make_positional_encoding_table(d_model, max_len=max_len)

    ref = positional_encoding_reference(x, pe)

    out = positional_encoding_forward(x, pe)
    out = jax.block_until_ready(out)

    assert out.shape == (seq_len, batch, d_model)
    assert jnp.allclose(out, ref, atol=1e-6, rtol=1e-6)

    print("KERNEL_OK")
</pallas_src>

<mosaic_0001>
module attributes {stable_mosaic.version = 11 : i64} {
  func.func @_pe_add_kernel(%arg0: i32, %arg1: i32, %arg2: memref<8x64xf32, #tpu.memory_space<vmem>>, %arg3: memref<1x64xf32, #tpu.memory_space<vmem>>, %arg4: memref<8x64xf32, #tpu.memory_space<vmem>>) attributes {dimension_semantics = [#tpu.dimension_semantics<parallel>, #tpu.dimension_semantics<parallel>], iteration_bounds = array<i64: 1, 1>, scalar_prefetch = 0 : i64, scratch_operands = 0 : i64, tpu.core_type = #tpu.core_type<tc>, window_params = [{transform_indices = @transform_0, window_bounds = array<i64: 8, 64>}, {transform_indices = @transform_1, window_bounds = array<i64: 1, 64>}, {transform_indices = @transform_2, window_bounds = array<i64: 8, 64>}]} {
    %c0 = arith.constant 0 : index
    %c0_0 = arith.constant 0 : index
    %0 = vector.load %arg2[%c0, %c0_0] : memref<8x64xf32, #tpu.memory_space<vmem>>, vector<8x64xf32>
    %c0_1 = arith.constant 0 : index
    %c0_2 = arith.constant 0 : index
    %1 = vector.load %arg3[%c0_1, %c0_2] : memref<1x64xf32, #tpu.memory_space<vmem>>, vector<1x64xf32>
    %2 = vector.broadcast %1 : vector<1x64xf32> to vector<8x64xf32>
    %3 = arith.addf %0, %2 : vector<8x64xf32>
    %c0_3 = arith.constant 0 : index
    %c0_4 = arith.constant 0 : index
    %4 = vector.load %arg4[%c0_3, %c0_4] : memref<8x64xf32, #tpu.memory_space<vmem>>, vector<8x64xf32>
    tpu.vector_store %arg4[%c0_3, %c0_4], %3 {strides = array<i32>} : memref<8x64xf32, #tpu.memory_space<vmem>>, vector<8x64xf32>,
    return
  }
  func.func @transform_0(%arg0: i32, %arg1: i32) -> (i32, i32) {
    %c0_i32 = arith.constant 0 : i32
    return %arg0, %arg1 : i32, i32
  }
  func.func @transform_1(%arg0: i32, %arg1: i32) -> (i32, i32) {
    %c0_i32 = arith.constant 0 : i32
    %c0_i32_0 = arith.constant 0 : i32
    return %c0_i32, %arg1 : i32, i32
  }
  func.func @transform_2(%arg0: i32, %arg1: i32) -> (i32, i32) {
    %c0_i32 = arith.constant 0 : i32
    return %arg0, %arg1 : i32, i32
  }
}

</mosaic_0001>

<llo_original>
// kernel: tpu_custom_call.1
$region0: #{tpu_custom_call.1}
  #allocation0 [shape = 'u32[]', space=smem, size = 0x4, offset = 0x4, fixed_abs, tag = 'smem constant byte address 0x4 - core index']
  #allocation1 [shape = 'u32[72,128]{1,0:T(1,128)}', space=vmem, size = 0x9000, scoped, tag = 'internal scratch']
  %s0 = inlined_call_operand.hbm [shape: f32[8,64], index: 0, kind: input, shape index: {}]
  %s1 = inlined_call_operand.hbm [shape: f32[1,64], index: 1, kind: input, shape index: {}]
  %s2 = inlined_call_operand.hbm [shape: f32[8,64], index: 2, kind: output, shape index: {}]
  %s3 = sld [smem:[#allocation0]]
  $region26: #{tpu_custom_call.1} parent=0
    _
  %s5 = ssub.s32 1, %s3
  %s6 = scalar_select 0, %s5, %s3
  $region1: #{tpu_custom_call.1} parent=0
    #allocation2 [shape = 'u8[4096]{0}', space=vmem, size = 0x1000, scoped, tag = 'input window, operand 0, single buffered']
    #allocation3 [shape = 's32[1]{0}', space=sflag, size = 0x4, scoped, tag = 'scoped memory for tpu_custom_call.1']
    #allocation4 [shape = 's32[1]{0}', space=sflag, size = 0x4, scoped, tag = 'scoped memory for tpu_custom_call.1']
    #allocation5 [shape = 'u8[512]{0}', space=vmem, size = 0x400, scoped, tag = 'input window, operand 1, single buffered']
    #allocation6 [shape = 's32[1]{0}', space=sflag, size = 0x4, scoped, tag = 'scoped memory for tpu_custom_call.1']
    #allocation7 [shape = 'u8[4096]{0}', space=vmem, size = 0x1000, scoped, tag = 'output window, operand 0, single buffered']
    %7 = vsyncpa [#allocation3], 0
    %8 = vsyncpa [#allocation6], 0
    %9 = vsyncpa [#allocation4], 0
    // Predicated region
    $region2: #{tpu_custom_call.1} parent=1 // pred_check
      _
    $region3: #{tpu_custom_call.1} parent=1 // pred_check_branch
      %11 = sbr.rel (0) target = $region5
    $region4: #{tpu_custom_call.1} parent=1 // pred_region
      %13 = vsyncadd [#allocation3], 0
      %s15 = sshll.u32 %s0, 4
      %s16 = int_to_ptr.hbm [resolvable:$true] %s15
      %s17 = sshll.u32 [#allocation2], 4
      %s18 = int_to_ptr.vmem [resolvable:$true] %s17
      %20 = dma.hbm_to_vmem [thread:$0]  %s16, 128, %s18, [#allocation3]
    $region5: #{tpu_custom_call.1} parent=1 // pred_fallthru
      _
    // Predicated region
    $region6: #{tpu_custom_call.1} parent=1 // pred_check
      _
    $region7: #{tpu_custom_call.1} parent=1 // pred_check_branch
      %22 = sbr.rel (0) target = $region9
    $region8: #{tpu_custom_call.1} parent=1 // pred_region
      %24 = vsyncadd [#allocation6], 0
      %s26 = sshll.u32 %s1, 4
      %s27 = int_to_ptr.hbm [resolvable:$true] %s26
      %s28 = sshll.u32 [#allocation5], 4
      %s29 = int_to_ptr.vmem [resolvable:$true] %s28
      %31 = dma.hbm_to_vmem [thread:$0]  %s27, 16, %s29, [#allocation6]
    $region9: #{tpu_custom_call.1} parent=1 // pred_fallthru
      _
    // Predicated region
    $region10: #{tpu_custom_call.1} parent=1 // pred_check
      _
    $region11: #{tpu_custom_call.1} parent=1 // pred_check_branch
      %33 = sbr.rel (0) target = $region13
    $region12: #{tpu_custom_call.1} parent=1 // pred_region
      %35 = dma.done [#allocation3], 128
    $region13: #{tpu_custom_call.1} parent=1 // pred_fallthru
      _
    // Predicated region
    $region14: #{tpu_custom_call.1} parent=1 // pred_check
      _
    $region15: #{tpu_custom_call.1} parent=1 // pred_check_branch
      %37 = sbr.rel (0) target = $region17
    $region16: #{tpu_custom_call.1} parent=1 // pred_region
      %39 = dma.done [#allocation6], 16
    $region17: #{tpu_custom_call.1} parent=1 // pred_fallthru
      _
    %v40 = vld [vmem:[#allocation2] sm:$0xff]
    %v41 = vld [vmem:[#allocation5] sm:$0x1]
    %v43 = vperm.slane %v41, 0
    %v45 = vadd.f32 %v40, %v43
    %vm46 = vcmask 523264
    %47 = vst.msk [vmem:[#allocation7] sm:$0xff] %vm46, %v45
    // Predicated region
    $region18: #{tpu_custom_call.1} parent=1 // pred_check
      _
    $region19: #{tpu_custom_call.1} parent=1 // pred_check_branch
      %49 = sbr.rel (0) target = $region21
    $region20: #{tpu_custom_call.1} parent=1 // pred_region
      %51 = vsyncadd [#allocation4], 0
      %s53 = sshll.u32 [#allocation7], 4
      %s54 = int_to_ptr.vmem [resolvable:$true] %s53
      %s55 = sshll.u32 %s2, 4
      %s56 = int_to_ptr.hbm [resolvable:$true] %s55
      %58 = dma.vmem_to_hbm [thread:$0]  %s54, 128, %s56, [#allocation4]
    $region21: #{tpu_custom_call.1} parent=1 // pred_fallthru
      _
    // Predicated region
    $region22: #{tpu_custom_call.1} parent=1 // pred_check
      _
    $region23: #{tpu_custom_call.1} parent=1 // pred_check_branch
      %60 = sbr.rel (0) target = $region25
    $region24: #{tpu_custom_call.1} parent=1 // pred_region
      %62 = dma.done [#allocation4], 128
    $region25: #{tpu_custom_call.1} parent=1 // pred_fallthru
      _
    %63 = vsyncpa [#allocation3], 1
    %64 = vsyncpa [#allocation6], 1
    %65 = vsyncpa [#allocation4], 1

</llo_original>
